<compile_context>
chip_gen: v7x
topology: tpu7x:2x2x1
jax: 0.10.0
libtpu: 0.0.40
codegen_flags: <defaults>
</compile_context>

<pallas_src>
import functools

import jax
import jax.numpy as jnp
from jax.experimental import pallas as pl
from jax.experimental.pallas import tpu as pltpu


def _logreg_kernel(x_ref, w_ref, b_ref, o_ref):
    # x_ref: (TB, Z) streaming dtype   w_ref: (1, Z) f32 (resident)
    # b_ref: (1, 1) f32 in SMEM        o_ref: (TB, 1) f32
    xl = jnp.log(x_ref[...])                      # EUP; stays bf16 if x is bf16
    w = w_ref[...]                                # (1, Z), broadcasts over rows
    # VPU multiply + XLU cross-lane reduce, f32 accumulate (no MXU for N=1).
    y = jnp.sum(xl.astype(jnp.float32) * w, axis=-1, keepdims=True) + b_ref[0, 0]
    o_ref[...] = jax.nn.sigmoid(y).astype(o_ref.dtype)


def _round_up(n, m):
    return ((n + m - 1) // m) * m


def _round_down(n, m):
    return (n // m) * m


def _vmem_capacity_bytes():
    # Generation-aware physical VMEM (v5e/v6e: 128 MiB; v7x: 64 MiB per TC).
    try:
        cap = getattr(pltpu.get_tpu_info(), "vmem_capacity_bytes", None)
        if cap:
            return int(cap)
    except Exception:
        pass
    return 64 << 20  # conservative fallback = v7x per-TC physical VMEM


@functools.partial(jax.jit, static_argnames=("batch_tile",))
def logistic_regression_forward(z, w, b, batch_tile=2048):
    """y = sigmoid(log(flatten(z, 1)) @ w.T + b).

    z: (B, ...) with prod(trailing dims) == z_dim, strictly positive values.
       (Passing z as bfloat16 halves the HBM read stream; the kernel casts to
       f32 for the accumulate, so v5e stays correct.)
    w: (1, z_dim)  (PyTorch nn.Linear weight layout)
    b: (1,)        (PyTorch nn.Linear bias)
    """
    B = z.shape[0]
    x = z.reshape(B, -1)                         # torch.flatten(z, start_dim=1)
    Z = x.shape[1]

    itemsize = jnp.dtype(x.dtype).itemsize
    Z_pad = _round_up(Z, 128)                    # lane padding of x / w blocks

    # --- batch-tile selection ------------------------------------------------
    vmem_cap = _vmem_capacity_bytes()
    x_budget = int(vmem_cap * 0.6)               # budget for the x double-buffer
    tile_vmem_max = max(8, _round_down(x_budget // (2 * Z_pad * itemsize), 8))
    tile = max(8, min(batch_tile, tile_vmem_max, _round_up(B, 8)))

    # Prefer >= ~8 grid steps (v7x: 2 TCs x >= 4 pipelined steps each) as long
    # as each step still streams >= ~1 MiB of x (per-step-overhead floor).
    amort_floor = max(8, _round_down((1 << 20) // (Z_pad * itemsize), 8))
    steps_tile = _round_up(pl.cdiv(B, 8), 8)
    if steps_tile >= amort_floor:
        tile = min(tile, steps_tile)

    grid = (pl.cdiv(B, tile),)                   # last block may be partial

    w2d = w.reshape(1, Z).astype(jnp.float32)
    b2d = b.reshape(1, 1).astype(jnp.float32)

    # --- VMEM sizing with (8,128) layout padding -----------------------------
    need = (2 * tile * Z_pad * itemsize          # x double buffer
            + 2 * 8 * Z_pad * 4                  # (1,Z) w block: sublane 1 -> 8
            + 2 * tile * 128 * 4                 # (tile,1) out block: lane 1 -> 128
            + (1 << 20))                         # headroom
    vmem_limit = None
    if need > (12 << 20):
        vmem_limit = int(min(max(need, 16 << 20), vmem_cap - (8 << 20)))

    cost = pl.CostEstimate(
        flops=2 * B * Z,                         # mul + add per element
        transcendentals=B * Z + 2 * B,           # log per element, ~2/row sigmoid
        bytes_accessed=B * Z * itemsize + Z * 4 + 4 + B * 4,
    )

    return pl.pallas_call(
        _logreg_kernel,
        out_shape=jax.ShapeDtypeStruct((B, 1), jnp.float32),
        grid_spec=pltpu.PrefetchScalarGridSpec(
            num_scalar_prefetch=0,
            grid=grid,
            in_specs=[
                pl.BlockSpec((tile, Z), lambda i: (i, 0)),          # x (streamed)
                pl.BlockSpec((1, Z), lambda i: (0, 0)),             # w (resident)
                pl.BlockSpec(memory_space=pltpu.MemorySpace.SMEM),  # b (scalar)
            ],
            out_specs=pl.BlockSpec((tile, 1), lambda i: (i, 0)),
        ),
        compiler_params=pltpu.CompilerParams(
            dimension_semantics=("parallel",),   # shard batch across v7x TCs
            vmem_limit_bytes=vmem_limit,
        ),
        cost_estimate=cost,
    )(x, w2d, b2d)


def init_params(key, z_dim=512):
    """Deterministic init mirroring nn.Linear(z_dim, 1) shapes."""
    k1, k2 = jax.random.split(key)
    bound = 1.0 / (z_dim ** 0.5)
    w = jax.random.uniform(k1, (1, z_dim), jnp.float32, -bound, bound)
    b = jax.random.uniform(k2, (1,), jnp.float32, -bound, bound)
    return w, b


if __name__ == "__main__":
    key = jax.random.PRNGKey(0)
    k_in, k_par = jax.random.split(key)

    z_dim = 512
    B = 8
    # Strictly-positive input (log is applied), with trailing dims that flatten
    # to z_dim (8*8*8 = 512), exercising torch.flatten(z, start_dim=1).
    z = jax.random.uniform(k_in, (B, 8, 8, 8), jnp.float32, minval=0.1, maxval=2.0)

    w, b = init_params(k_par, z_dim)

    out = jax.block_until_ready(logistic_regression_forward(z, w, b))

    # Pure-JAX reference check.
    x = z.reshape(B, -1)
    ref = jax.nn.sigmoid(jnp.log(x) @ w.T + b)
    assert out.shape == (B, 1)
    assert jnp.allclose(out, ref, atol=1e-5, rtol=1e-5), "mismatch vs reference"

    print("KERNEL_OK")
</pallas_src>

<mosaic_0001>
module attributes {stable_mosaic.version = 11 : i64} {
  func.func @_logreg_kernel(%arg0: i32, %arg1: memref<8x512xf32, #tpu.memory_space<vmem>>, %arg2: memref<1x512xf32, #tpu.memory_space<vmem>>, %arg3: memref<1x1xf32, #tpu.memory_space<smem>>, %arg4: memref<8x1xf32, #tpu.memory_space<vmem>>) attributes {dimension_semantics = [#tpu.dimension_semantics<parallel>], iteration_bounds = array<i64: 1>, scalar_prefetch = 0 : i64, scratch_operands = 0 : i64, tpu.core_type = #tpu.core_type<tc>, window_params = [{transform_indices = @transform_0, window_bounds = array<i64: 8, 512>}, {pipeline_mode = #tpu.pipeline_mode<synchronous>, transform_indices = @transform_1, window_bounds = array<i64: 1, 512>}, {transform_indices = @transform_2, window_bounds = array<i64: 1, 1>}, {transform_indices = @transform_3, window_bounds = array<i64: 8, 1>}]} {
    %c0 = arith.constant 0 : index
    %c0_0 = arith.constant 0 : index
    %0 = vector.load %arg1[%c0, %c0_0] : memref<8x512xf32, #tpu.memory_space<vmem>>, vector<8x512xf32>
    %1 = math.log %0 : vector<8x512xf32>
    %c0_1 = arith.constant 0 : index
    %c0_2 = arith.constant 0 : index
    %2 = vector.load %arg2[%c0_1, %c0_2] : memref<1x512xf32, #tpu.memory_space<vmem>>, vector<1x512xf32>
    %3 = vector.broadcast %2 : vector<1x512xf32> to vector<8x512xf32>
    %4 = arith.mulf %1, %3 : vector<8x512xf32>
    %cst = arith.constant dense<0.000000e+00> : vector<8xf32>
    %5 = vector.multi_reduction <add>, %4, %cst [1] : vector<8x512xf32> to vector<8xf32>
    %6 = vector.shape_cast %5 : vector<8xf32> to vector<8x1xf32>
    %c0_3 = arith.constant 0 : index
    %c0_4 = arith.constant 0 : index
    %7 = memref.load %arg3[%c0_3, %c0_4] : memref<1x1xf32, #tpu.memory_space<smem>>
    %8 = vector.broadcast %7 : f32 to vector<8x1xf32>
    %9 = arith.addf %6, %8 : vector<8x1xf32>
    %10 = arith.negf %9 : vector<8x1xf32>
    %11 = math.exp %10 : vector<8x1xf32>
    %cst_5 = arith.constant 1.000000e+00 : f32
    %12 = vector.broadcast %cst_5 : f32 to vector<8x1xf32>
    %13 = arith.addf %12, %11 : vector<8x1xf32>
    %14 = arith.divf %12, %13 : vector<8x1xf32>
    %c0_6 = arith.constant 0 : index
    %c0_7 = arith.constant 0 : index
    %15 = vector.load %arg4[%c0_6, %c0_7] : memref<8x1xf32, #tpu.memory_space<vmem>>, vector<8x1xf32>
    tpu.vector_store %arg4[%c0_6, %c0_7], %14 {strides = array<i32>} : memref<8x1xf32, #tpu.memory_space<vmem>>, vector<8x1xf32>,
    return
  }
  func.func @transform_0(%arg0: i32) -> (i32, i32) {
    %c0_i32 = arith.constant 0 : i32
    %c0_i32_0 = arith.constant 0 : i32
    return %arg0, %c0_i32 : i32, i32
  }
  func.func @transform_1(%arg0: i32) -> (i32, i32) {
    %c0_i32 = arith.constant 0 : i32
    %c0_i32_0 = arith.constant 0 : i32
    %c0_i32_1 = arith.constant 0 : i32
    return %c0_i32, %c0_i32_0 : i32, i32
  }
  func.func @transform_2(%arg0: i32) -> (i32, i32) {
    %c0_i32 = arith.constant 0 : i32
    %c0_i32_0 = arith.constant 0 : i32
    %c0_i32_1 = arith.constant 0 : i32
    return %c0_i32, %c0_i32_0 : i32, i32
  }
  func.func @transform_3(%arg0: i32) -> (i32, i32) {
    %c0_i32 = arith.constant 0 : i32
    %c0_i32_0 = arith.constant 0 : i32
    return %arg0, %c0_i32 : i32, i32
  }
}

</mosaic_0001>

<llo_original>
// kernel: logistic_regression_forward.1
$region0: #{logistic_regression_forward.1}
  #allocation0 [shape = 'u32[]', space=smem, size = 0x4, offset = 0x4, fixed_abs, tag = 'smem constant byte address 0x4 - core index']
  #allocation1 [shape = 'u32[144,128]{1,0:T(1,128)}', space=vmem, size = 0x12000, scoped, tag = 'internal scratch']
  #allocation2 [shape = 'f32[1,1]{1,0:T(1,128)S(6)}', space=smem, size = 0x200, scoped, tag = 'scoped memory for logistic_regression_forward.1']
  %s0 = inlined_call_operand.vmem [shape: f32[8,512], index: 0, kind: input, shape index: {}]
  %s1 = inlined_call_operand.vmem [shape: f32[1,512], index: 1, kind: input, shape index: {}]
  %s2 = inlined_call_operand.<no memory space> [shape: f32[1,1], index: 2, kind: input, shape index: {}]
  %s3 = inlined_call_operand.vmem [shape: f32[8,1], index: 3, kind: output, shape index: {}]
  %s4 = sld [smem:[#allocation0]]
  $region22: #{logistic_regression_forward.1} parent=0
    _
  %s6 = ssub.s32 1, %s4
  %s7 = scalar_select 0, %s6, %s4
  %8 = sst [smem:[#allocation2]] %s2
  // Predicated region
  $region2: #{logistic_regression_forward.1} parent=0 // pred_check
    _
  $region3: #{logistic_regression_forward.1} parent=0 // pred_check_branch
    %10 = sbr.rel (0) target = $region5
  $region4: #{logistic_regression_forward.1} parent=0 // pred_region
    _
  $region5: #{logistic_regression_forward.1} parent=0 // pred_fallthru
    _
  // Predicated region
  $region6: #{logistic_regression_forward.1} parent=0 // pred_check
    _
  $region7: #{logistic_regression_forward.1} parent=0 // pred_check_branch
    %12 = sbr.rel (0) target = $region9
  $region8: #{logistic_regression_forward.1} parent=0 // pred_region
    _
  $region9: #{logistic_regression_forward.1} parent=0 // pred_fallthru
    _
  // Predicated region
  $region10: #{logistic_regression_forward.1} parent=0 // pred_check
    _
  $region11: #{logistic_regression_forward.1} parent=0 // pred_check_branch
    %14 = sbr.rel (0) target = $region13
  $region12: #{logistic_regression_forward.1} parent=0 // pred_region
    _
  $region13: #{logistic_regression_forward.1} parent=0 // pred_fallthru
    _
  %v15 = vld [vmem:[%s0] sm:$0xff]
  %v16 = vld [vmem:[%s0 + $0x8] sm:$0xff]
  %v17 = vld [vmem:[%s0 + $0x10] sm:$0xff]
  %v18 = vld [vmem:[%s0 + $0x18] sm:$0xff]
  %v19 = vlog2.pop %v15
  %v20 = vmul.f32 %v19, 0.6931472
  %v21 = vlog2.pop %v16
  %v22 = vmul.f32 %v21, 0.6931472
  %v23 = vlog2.pop %v17
  %v24 = vmul.f32 %v23, 0.6931472
  %v25 = vlog2.pop %v18
  %v26 = vmul.f32 %v25, 0.6931472
  %v27 = vld [vmem:[%s1] sm:$0xf]
  %v29 = vlaneseq
  %v30 = vshrl.u32 %v29, 7
  %v31 = vsub.s32 0, %v30
  %v32 = vrot.slane %v27, %v31
  %v33 = vlaneseq
  %v34 = vshrl.u32 %v33, 7
  %v35 = vsub.s32 1, %v34
  %v36 = vrot.slane %v27, %v35
  %v37 = vlaneseq
  %v38 = vshrl.u32 %v37, 7
  %v39 = vsub.s32 2, %v38
  %v40 = vrot.slane %v27, %v39
  %v41 = vlaneseq
  %v42 = vshrl.u32 %v41, 7
  %v43 = vsub.s32 3, %v42
  %v44 = vrot.slane %v27, %v43
  %v49 = vmul.f32 %v20, %v32
  %v50 = vmul.f32 %v22, %v36
  %v51 = vmul.f32 %v24, %v40
  %v52 = vmul.f32 %v26, %v44
  %v53 = vadd.f32 %v49, %v50
  %v54 = vadd.f32 %v53, %v51
  %v55 = vadd.f32 %v54, %v52
  %56 = vadd.xlane.f32.xlu0 %v55
  %v57 = vpop.xlane.xlu0 %56
  %s58 = sld [smem:[#allocation2]]
  %v59 = vstv %s58
  %v60 = vadd.f32 %v57, %v59
  %v61 = vxor.u32 %v60, 2147483648
  %v62 = vmul.f32 %v61, 1.442695
  %v63 = vpow.pop %v62
  %v64 = vadd.f32 %v63, 1.0
  %v65 = vrcp.pop %v64
  %v66 = vmul.f32 1.0, %v65
  %vm67 = vcmask 7168
  %68 = vst.msk [vmem:[%s3] sm:$0xff] %vm67, %v66
  // Predicated region
  $region14: #{logistic_regression_forward.1} parent=0 // pred_check
    _
  $region15: #{logistic_regression_forward.1} parent=0 // pred_check_branch
    %70 = sbr.rel (0) target = $region17
  $region16: #{logistic_regression_forward.1} parent=0 // pred_region
    _
  $region17: #{logistic_regression_forward.1} parent=0 // pred_fallthru
    _
  // Predicated region
  $region18: #{logistic_regression_forward.1} parent=0 // pred_check
    _
  $region19: #{logistic_regression_forward.1} parent=0 // pred_check_branch
    %72 = sbr.rel (0) target = $region21
  $region20: #{logistic_regression_forward.1} parent=0 // pred_region
    _
  $region21: #{logistic_regression_forward.1} parent=0 // pred_fallthru
    _

</llo_original>
